<compile_context>
chip_gen: v5e
topology: v5e:2x2
jax: 0.10.0
libtpu: 0.0.40
codegen_flags: <defaults>
</compile_context>

<pallas_src>
import jax
import jax.numpy as jnp
from jax import lax
from jax.experimental import pallas as pl
from jax.experimental.pallas import tpu as pltpu


def _round_up(x, m):
    return (x + m - 1) // m * m


def _linear_kernel(k_ref, w_ref, b_ref, o_ref, acc_ref):
    """One (row-tile, n-tile) grid step of  out = K @ w^T + b.

    k_ref:   (tb, tn) VMEM tile of K
    w_ref:   (1, tn)  VMEM tile of the weight row
    b_ref:   (1,)     SMEM bias
    o_ref:   (1, tb)  lane-dense output row for this row tile
    acc_ref: (1, tb)  f32 VMEM accumulator (persists across the N grid axis)
    """
    n_idx = pl.program_id(1)

    @pl.when(n_idx == 0)
    def _init():
        acc_ref[...] = jnp.zeros_like(acc_ref)

    # (1, tn) contracted with (tb, tn) over the last dim -> (1, tb), lane-dense.
    acc_ref[...] += lax.dot_general(
        w_ref[...],
        k_ref[...],
        dimension_numbers=(((1,), (1,)), ((), ())),
        preferred_element_type=jnp.float32,
    )

    @pl.when(n_idx == pl.num_programs(1) - 1)
    def _finalize():
        o_ref[...] = (acc_ref[...] + b_ref[0]).astype(o_ref.dtype)


def _pick_tiles(B, N, itemsize):
    # Reduction (N) tile: keep the whole feature dim when modest, otherwise walk it
    # in 512-wide lane-aligned chunks.
    if N <= 2048:
        tn = N
        n_pad = N
    else:
        tn = 512
        n_pad = _round_up(N, tn)

    # Row tile: biggest lane-dense tile such that one K buffer stays <= ~8 MiB
    # (<= ~16 MiB double-buffered, comfortably inside the 32 MiB scoped-VMEM limit).
    per_buffer_budget = 8 * 1024 * 1024
    tb_cap = (per_buffer_budget // max(1, tn * itemsize)) // 128 * 128
    tb_cap = int(min(max(tb_cap, 128), 4096))

    if B <= tb_cap:
        tb = _round_up(B, 8)      # single row tile; block == full padded dim
    else:
        tb = tb_cap               # multiple of 128 -> lane-dense output blocks
    b_pad = _round_up(B, tb)
    return tb, tn, b_pad, n_pad


def linier_kinship_forward(K, weight, bias, *, cast_to_bf16=False):
    """Pallas TPU forward for LinierKinship:  K @ weight.T + bias.

    K:      (B, N)
    weight: (1, N)   (torch nn.Linear weight layout)
    bias:   (1,)
    returns (B, 1) float32
    """
    B, N = K.shape
    assert weight.shape == (1, N)
    assert bias.shape == (1,)

    compute_dtype = jnp.bfloat16 if cast_to_bf16 else jnp.float32
    k_in = K.astype(compute_dtype)
    w_in = weight.astype(compute_dtype)
    b_in = bias.astype(jnp.float32)

    itemsize = jnp.dtype(compute_dtype).itemsize
    tb, tn, b_pad, n_pad = _pick_tiles(B, N, itemsize)

    if (b_pad, n_pad) != (B, N):
        k_in = jnp.pad(k_in, ((0, b_pad - B), (0, n_pad - N)))
    if n_pad != N:
        w_in = jnp.pad(w_in, ((0, 0), (0, n_pad - N)))

    grid = (b_pad // tb, n_pad // tn)

    out2d = pl.pallas_call(
        _linear_kernel,
        out_shape=jax.ShapeDtypeStruct((1, b_pad), jnp.float32),
        grid_spec=pltpu.PrefetchScalarGridSpec(
            num_scalar_prefetch=0,
            grid=grid,
            in_specs=[
                pl.BlockSpec((tb, tn), lambda i, k: (i, k)),       # K row/col tile
                pl.BlockSpec((1, tn), lambda i, k: (0, k)),        # weight chunk
                pl.BlockSpec(memory_space=pltpu.SMEM),             # scalar bias
            ],
            out_specs=pl.BlockSpec((1, tb), lambda i, k: (0, i)),  # lane-dense row
            scratch_shapes=[pltpu.VMEM((1, tb), jnp.float32)],
        ),
        compiler_params=pltpu.CompilerParams(
            dimension_semantics=("parallel", "arbitrary"),
            vmem_limit_bytes=32 * 1024 * 1024,
        ),
    )(k_in, w_in, b_in)

    return out2d.reshape(-1)[:B].reshape(B, 1)


if __name__ == "__main__":
    key = jax.random.PRNGKey(0)
    k_key, w_key, b_key, k2_key = jax.random.split(key, 4)

    # Small shapes consistent with the module: N = 32 kinship features, B = 16 rows.
    B, N = 16, 32
    weight = jax.random.normal(w_key, (1, N), dtype=jnp.float32) * 0.1
    bias = jax.random.normal(b_key, (1,), dtype=jnp.float32) * 0.1
    K = jax.random.normal(k_key, (B, N), dtype=jnp.float32)

    out = jax.block_until_ready(linier_kinship_forward(K, weight, bias))
    ref = K @ weight.T + bias
    assert out.shape == (B, 1)
    assert jnp.allclose(out, ref, atol=1e-5, rtol=1e-5)

    # Second check: exercises the N-axis reduction grid + zero padding of B and N.
    B2, N2 = 300, 2304
    w2_key, b2_key = jax.random.split(w_key)
    weight2 = jax.random.normal(w2_key, (1, N2), dtype=jnp.float32) * 0.05
    bias2 = jax.random.normal(b2_key, (1,), dtype=jnp.float32) * 0.05
    K2 = jax.random.normal(k2_key, (B2, N2), dtype=jnp.float32)

    out2 = jax.block_until_ready(linier_kinship_forward(K2, weight2, bias2))
    ref2 = K2 @ weight2.T + bias2
    assert out2.shape == (B2, 1)
    assert jnp.allclose(out2, ref2, atol=1e-3, rtol=1e-3)

    print("KERNEL_OK")
</pallas_src>

<mosaic_0001>
module attributes {stable_mosaic.version = 11 : i64} {
  func.func @_linear_kernel(%arg0: i32, %arg1: i32, %arg2: memref<16x32xf32, #tpu.memory_space<vmem>>, %arg3: memref<1x32xf32, #tpu.memory_space<vmem>>, %arg4: memref<1xf32, #tpu.memory_space<smem>>, %arg5: memref<1x16xf32, #tpu.memory_space<vmem>>, %arg6: memref<1x16xf32, #tpu.memory_space<vmem>>) attributes {dimension_semantics = [#tpu.dimension_semantics<parallel>, #tpu.dimension_semantics<arbitrary>], iteration_bounds = array<i64: 1, 1>, scalar_prefetch = 0 : i64, scratch_operands = 1 : i64, tpu.core_type = #tpu.core_type<tc>, window_params = [{transform_indices = @transform_0, window_bounds = array<i64: 16, 32>}, {transform_indices = @transform_1, window_bounds = array<i64: 1, 32>}, {transform_indices = @transform_2, window_bounds = array<i64: 1>}, {transform_indices = @transform_3, window_bounds = array<i64: 1, 16>}]} {
    %c0_i32 = arith.constant 0 : i32
    %0 = arith.cmpi eq, %arg1, %c0_i32 : i32
    %1 = arith.extui %0 : i1 to i32
    %c0_i32_0 = arith.constant 0 : i32
    %2 = arith.cmpi ne, %1, %c0_i32_0 : i32
    scf.if %2 {
      %cst_10 = arith.constant 0.000000e+00 : f32
      %12 = vector.broadcast %cst_10 : f32 to vector<1x16xf32>
      %c0_11 = arith.constant 0 : index
      %c0_12 = arith.constant 0 : index
      %13 = vector.load %arg6[%c0_11, %c0_12] : memref<1x16xf32, #tpu.memory_space<vmem>>, vector<1x16xf32>
      tpu.vector_store %arg6[%c0_11, %c0_12], %12 {strides = array<i32>} : memref<1x16xf32, #tpu.memory_space<vmem>>, vector<1x16xf32>,
    } else {
    }
    %c0 = arith.constant 0 : index
    %c0_1 = arith.constant 0 : index
    %3 = vector.load %arg6[%c0, %c0_1] : memref<1x16xf32, #tpu.memory_space<vmem>>, vector<1x16xf32>
    %c0_2 = arith.constant 0 : index
    %c0_3 = arith.constant 0 : index
    %4 = vector.load %arg3[%c0_2, %c0_3] : memref<1x32xf32, #tpu.memory_space<vmem>>, vector<1x32xf32>
    %c0_4 = arith.constant 0 : index
    %c0_5 = arith.constant 0 : index
    %5 = vector.load %arg2[%c0_4, %c0_5] : memref<16x32xf32, #tpu.memory_space<vmem>>, vector<16x32xf32>
    %cst = arith.constant dense<0.000000e+00> : vector<1x16xf32>
    %6 = tpu.matmul %4, %5, %cst {dimension_numbers = #tpu.dot_dimension_numbers<[1], [1], [0], [0], [0, 0, 1, 0], [], []>} : vector<1x32xf32>, vector<16x32xf32>, vector<1x16xf32> -> vector<1x16xf32>
    %7 = arith.addf %3, %6 : vector<1x16xf32>
    %c0_6 = arith.constant 0 : index
    %c0_7 = arith.constant 0 : index
    %8 = vector.load %arg6[%c0_6, %c0_7] : memref<1x16xf32, #tpu.memory_space<vmem>>, vector<1x16xf32>
    tpu.vector_store %arg6[%c0_6, %c0_7], %7 {strides = array<i32>} : memref<1x16xf32, #tpu.memory_space<vmem>>, vector<1x16xf32>,
    %c0_i32_8 = arith.constant 0 : i32
    %9 = arith.cmpi eq, %arg1, %c0_i32_8 : i32
    %10 = arith.extui %9 : i1 to i32
    %c0_i32_9 = arith.constant 0 : i32
    %11 = arith.cmpi ne, %10, %c0_i32_9 : i32
    scf.if %11 {
      %c0_10 = arith.constant 0 : index
      %c0_11 = arith.constant 0 : index
      %12 = vector.load %arg6[%c0_10, %c0_11] : memref<1x16xf32, #tpu.memory_space<vmem>>, vector<1x16xf32>
      %c0_12 = arith.constant 0 : index
      %13 = memref.load %arg4[%c0_12] : memref<1xf32, #tpu.memory_space<smem>>
      %14 = vector.broadcast %13 : f32 to vector<1x16xf32>
      %15 = arith.addf %12, %14 : vector<1x16xf32>
      %c0_13 = arith.constant 0 : index
      %c0_14 = arith.constant 0 : index
      %16 = vector.load %arg5[%c0_13, %c0_14] : memref<1x16xf32, #tpu.memory_space<vmem>>, vector<1x16xf32>
      tpu.vector_store %arg5[%c0_13, %c0_14], %15 {strides = array<i32>} : memref<1x16xf32, #tpu.memory_space<vmem>>, vector<1x16xf32>,
    } else {
    }
    return
  }
  func.func @transform_0(%arg0: i32, %arg1: i32) -> (i32, i32) {
    %c0_i32 = arith.constant 0 : i32
    return %arg0, %arg1 : i32, i32
  }
  func.func @transform_1(%arg0: i32, %arg1: i32) -> (i32, i32) {
    %c0_i32 = arith.constant 0 : i32
    %c0_i32_0 = arith.constant 0 : i32
    return %c0_i32, %arg1 : i32, i32
  }
  func.func @transform_2(%arg0: i32, %arg1: i32) -> i32 {
    %c0_i32 = arith.constant 0 : i32
    %c0_i32_0 = arith.constant 0 : i32
    return %c0_i32 : i32
  }
  func.func @transform_3(%arg0: i32, %arg1: i32) -> (i32, i32) {
    %c0_i32 = arith.constant 0 : i32
    %c0_i32_0 = arith.constant 0 : i32
    return %c0_i32, %arg0 : i32, i32
  }
}

</mosaic_0001>

<llo_original>
// kernel: tpu_custom_call.1
$region0: #{tpu_custom_call.1}
  #allocation0 [shape = 'u32[]', space=smem, size = 0x4, offset = 0x4, fixed_abs, tag = 'smem constant byte address 0x4 - core index']
  #allocation1 [shape = 'u32[72,128]{1,0:T(1,128)}', space=vmem, size = 0x9000, scoped, tag = 'internal scratch']
  #allocation2 [shape = 'f32[1,16]{1,0:T(1,128)}', space=vmem, size = 0x200, scoped, tag = 'scratch operand']
  #allocation3 [shape = 'f32[1]{0:T(128)S(6)}', space=smem, size = 0x200, scoped, tag = 'scoped memory for tpu_custom_call.1']
  %s0 = inlined_call_operand.hbm [shape: f32[16,32], index: 0, kind: input, shape index: {}]
  %s1 = inlined_call_operand.vmem [shape: f32[1,32], index: 1, kind: input, shape index: {}]
  %s2 = inlined_call_operand.<no memory space> [shape: f32[1], index: 2, kind: input, shape index: {}]
  %s3 = inlined_call_operand.hbm [shape: f32[1,16], index: 3, kind: output, shape index: {}]
  %s4 = sld [smem:[#allocation0]]
  $region34: #{tpu_custom_call.1} parent=0
    _
  %s6 = ssub.s32 1, %s4
  %s7 = scalar_select 0, %s6, %s4
  %8 = sst [smem:[#allocation3]] %s2
  $region1: #{tpu_custom_call.1} parent=0
    #allocation4 [shape = 'u8[8192]{0}', space=vmem, size = 0x2000, scoped, tag = 'input window, operand 0, single buffered']
    #allocation5 [shape = 's32[1]{0}', space=sflag, size = 0x4, scoped, tag = 'scoped memory for tpu_custom_call.1']
    #allocation6 [shape = 's32[1]{0}', space=sflag, size = 0x4, scoped, tag = 'scoped memory for tpu_custom_call.1']
    #allocation7 [shape = 'u8[512]{0}', space=vmem, size = 0x400, scoped, tag = 'output window, operand 0, single buffered']
    %9 = vsyncpa [#allocation5], 0
    %10 = vsyncpa [#allocation6], 0
    // Predicated region
    $region2: #{tpu_custom_call.1} parent=1 // pred_check
      _
    $region3: #{tpu_custom_call.1} parent=1 // pred_check_branch
      %12 = sbr.rel (0) target = $region5
    $region4: #{tpu_custom_call.1} parent=1 // pred_region
      %14 = vsyncadd [#allocation5], 0
      %s15 = sshll.u32 %s0, 4
      %s16 = int_to_ptr.hbm [resolvable:$true] %s15
      %s17 = sshll.u32 [#allocation4], 4
      %s18 = int_to_ptr.vmem [resolvable:$true] %s17
      %23 = dma.hbm_to_vmem [thread:$0]  %s16, 256, %s18, [#allocation5], 128, 128, 8
    $region5: #{tpu_custom_call.1} parent=1 // pred_fallthru
      _
    // Predicated region
    $region6: #{tpu_custom_call.1} parent=1 // pred_check
      _
    $region7: #{tpu_custom_call.1} parent=1 // pred_check_branch
      %25 = sbr.rel (0) target = $region9
    $region8: #{tpu_custom_call.1} parent=1 // pred_region
      _
    $region9: #{tpu_custom_call.1} parent=1 // pred_fallthru
      _
    // Predicated region
    $region10: #{tpu_custom_call.1} parent=1 // pred_check
      _
    $region11: #{tpu_custom_call.1} parent=1 // pred_check_branch
      %27 = sbr.rel (0) target = $region13
    $region12: #{tpu_custom_call.1} parent=1 // pred_region
      _
    $region13: #{tpu_custom_call.1} parent=1 // pred_fallthru
      _
    // Predicated region
    $region14: #{tpu_custom_call.1} parent=1 // pred_check
      _
    $region15: #{tpu_custom_call.1} parent=1 // pred_check_branch
      %29 = sbr.rel (0) target = $region17
    $region16: #{tpu_custom_call.1} parent=1 // pred_region
      %31 = dma.done [#allocation5], 256
    $region17: #{tpu_custom_call.1} parent=1 // pred_fallthru
      _
    %p32 = scmp.eq.s32.totalorder 0, 0
    // Predicated region
    $region18: #{tpu_custom_call.1} parent=1 // pred_check
      %p33 = pneg %p32
    $region19: #{tpu_custom_call.1} parent=1 // pred_check_branch
      %35 = sbr.rel (%p33) target = $region21
    $region20: #{tpu_custom_call.1} parent=1 // pred_region
      %vm36 = vcmask 122880
      %37 = vst.msk [vmem:[#allocation2] sm:$0x1] %vm36, 0.0
    $region21: #{tpu_custom_call.1} parent=1 // pred_fallthru
      _
    %v38 = vld [vmem:[#allocation2] sm:$0x1]
    %v39 = vld [vmem:[%s1] sm:$0x1]
    %v40 = vld [vmem:[#allocation4] sm:$0xff]
    %v41 = vld [vmem:[#allocation4 + $0x8] sm:$0xff]
    %vm42 = vcmask 261120
    %v44 = vsel %vm42, %v39, 0
    %v47 = vsel %vm42, %v40, 0
    %v50 = vsel %vm42, %v41, 0
    %52 = vmatpush.xpose.msra.mxu0 0.0
    %53 = vmatpush.xpose.msra.mxu0 0.0
    %54 = vmatpush.xpose.msra.mxu0 0.0
    %55 = vmatpush.xpose.msra.mxu0 0.0
    %56 = vmatpush.xpose.msra.mxu0 0.0
    %57 = vmatpush.xpose.msra.mxu0 0.0
    %58 = vmatpush.xpose.msra.mxu0 0.0
    %59 = vmatpush.xpose.msra.mxu0 0.0
    %60 = vmatpush.xpose.msra.mxu0 0.0
    %61 = vmatpush.xpose.msra.mxu0 0.0
    %62 = vmatpush.xpose.msra.mxu0 0.0
    %63 = vmatpush.xpose.msra.mxu0 0.0
    %64 = vmatpush.xpose.msra.mxu0 0.0
    %65 = vmatpush.xpose.msra.mxu0 0.0
    %66 = vmatpush.xpose.msra.mxu0 %v50
    %67 = vmatpush.xpose.msra.mxu0 %v47
    %68 = vmatmul.f32.gmra.mxu0 %v44
    %v69 = vpop.f32.mrf.mxu0
    %v70 = vadd.f32 0.0, %v69
    %71 = vdwg.mxu0
    %v72 = vadd.f32 %v38, %v70
    %vm73 = vcmask 122880
    %74 = vst.msk [vmem:[#allocation2] sm:$0x1] %vm73, %v72
    // Predicated region
    $region22: #{tpu_custom_call.1} parent=1 // pred_check
      %p75 = pneg %p32
    $region23: #{tpu_custom_call.1} parent=1 // pred_check_branch
      %77 = sbr.rel (%p75) target = $region25
    $region24: #{tpu_custom_call.1} parent=1 // pred_region
      %v78 = vld [vmem:[#allocation2] sm:$0x1]
      %s79 = sld [smem:[#allocation3]]
      %v80 = vstv %s79
      %v81 = vadd.f32 %v78, %v80
      %82 = vst.msk [vmem:[#allocation7] sm:$0x1] %vm73, %v81
    $region25: #{tpu_custom_call.1} parent=1 // pred_fallthru
      _
    // Predicated region
    $region26: #{tpu_custom_call.1} parent=1 // pred_check
      _
    $region27: #{tpu_custom_call.1} parent=1 // pred_check_branch
      %84 = sbr.rel (0) target = $region29
    $region28: #{tpu_custom_call.1} parent=1 // pred_region
      %86 = vsyncadd [#allocation6], 0
      %s88 = sshll.u32 [#allocation7], 4
      %s89 = int_to_ptr.vmem [resolvable:$true] %s88
      %s90 = sshll.u32 %s3, 4
      %s91 = int_to_ptr.hbm [resolvable:$true] %s90
      %93 = dma.vmem_to_hbm [thread:$0]  %s89, 16, %s91, [#allocation6]
    $region29: #{tpu_custom_call.1} parent=1 // pred_fallthru
      _
    // Predicated region
    $region30: #{tpu_custom_call.1} parent=1 // pred_check
      _
    $region31: #{tpu_custom_call.1} parent=1 // pred_check_branch
      %95 = sbr.rel (0) target = $region33
    $region32: #{tpu_custom_call.1} parent=1 // pred_region
      %97 = dma.done [#allocation6], 16
    $region33: #{tpu_custom_call.1} parent=1 // pred_fallthru
      _
    %98 = vsyncpa [#allocation5], 1
    %99 = vsyncpa [#allocation6], 1

</llo_original>
